<compile_context>
chip_gen: v7x
topology: tpu7x:2x2x1
jax: 0.10.0
libtpu: 0.0.40
codegen_flags: <defaults>
</compile_context>

<pallas_src>
import jax
import jax.numpy as jnp
from jax.experimental import pallas as pl
from jax.experimental.pallas import tpu as pltpu

LANES = 128
SUBLANES = 8
MAX_ROW_TILE = 4096   # 4096 * 128 * 4 B = 2 MiB per input buffer; double-buffered
                      # (4 MiB) fits the default scoped VMEM on v5e/v6e/v7x.
NUM_SPLITS = 2        # leading "parallel" grid axis -> both TensorCores on v7x.


def _round_up(x, m):
    return ((x + m - 1) // m) * m


def _cdiv(a, b):
    return -(-a // b)


def _sumsq_kernel(x_ref, o_ref):
    # Grid: (split p [parallel], tile i [arbitrary / reduction axis]).
    # o_ref is a resident (8, 128) accumulator block per split (same block
    # index for every i), so it is written back to HBM only once per split.
    @pl.when(pl.program_id(1) == 0)
    def _():
        o_ref[...] = jnp.zeros_like(o_ref)

    x = x_ref[...]                                    # (row_tile, 128) f32
    xsq = x * x                                       # pure VPU elementwise
    # Fold the row tile into the (8, 128) accumulator: this is a sum of whole
    # vregs along the leading axis (VPU adds only).  The expensive cross-lane /
    # cross-sublane reduction is deferred to plain JAX on a tiny array.
    o_ref[...] += jnp.sum(xsq.reshape(-1, SUBLANES, LANES), axis=0)


def _pallas_sum_of_squares(parts, n):
    """parts: list of 1-D float32 arrays with total length n (> 0).
    Returns scalar float32 sum of squares over all elements."""
    rows_needed = max(1, _cdiv(n, LANES))
    row_tile = min(MAX_ROW_TILE, _round_up(rows_needed, SUBLANES))
    n_tiles = _round_up(_cdiv(rows_needed, row_tile), NUM_SPLITS)
    tiles_per_split = n_tiles // NUM_SPLITS
    total_rows = n_tiles * row_tile
    padded = total_rows * LANES

    # Fold zero padding into the concatenate (avoids a second full HBM pass).
    if padded > n:
        parts = parts + [jnp.zeros((padded - n,), jnp.float32)]
    slab = jnp.concatenate(parts).reshape(total_rows, LANES)

    partials = pl.pallas_call(
        _sumsq_kernel,
        out_shape=jax.ShapeDtypeStruct((NUM_SPLITS * SUBLANES, LANES), jnp.float32),
        grid_spec=pltpu.PrefetchScalarGridSpec(
            num_scalar_prefetch=0,
            grid=(NUM_SPLITS, tiles_per_split),
            in_specs=[
                pl.BlockSpec(
                    (row_tile, LANES),
                    lambda p, i: (p * tiles_per_split + i, 0),
                )
            ],
            # Lane-dense (8, 128) output block per split, resident across i.
            out_specs=pl.BlockSpec((SUBLANES, LANES), lambda p, i: (p, 0)),
        ),
        compiler_params=pltpu.CompilerParams(
            dimension_semantics=("parallel", "arbitrary"),
        ),
    )(slab)

    # Tiny final reduce (NUM_SPLITS*8 x 128 elements) in plain JAX.
    return jnp.sum(partials)


def variance_loss(grad):
    """Pallas equivalent of VarianceLoss.forward.

    grad: list (batch) of lists (layers) of jnp arrays (any shapes/dtypes).
    Returns: shape (1,) float32 array = (sum of all squared elements) / batch.
    """
    bs = len(grad)
    parts = [jnp.ravel(t).astype(jnp.float32) for sample in grad for t in sample]
    n = sum(int(p.shape[0]) for p in parts)
    if n == 0:
        # Empty gradient list -> loss is 0 (guards the zero-size grid case).
        return jnp.zeros((1,), jnp.float32)
    total = _pallas_sum_of_squares(parts, n)
    return jnp.reshape(total / bs, (1,))


# TODO(synk): forward_variance (per-parameter variance of the last layer) is a
# separate method of the module, not part of forward(); not implemented here.


if __name__ == "__main__":
    key = jax.random.PRNGKey(0)
    bs = 2
    # Per-layer gradient shapes (same "network" for every sample in the batch).
    layer_shapes = [(4, 8), (8,), (8, 16), (16,), (16, 32)]

    grad = []
    for j in range(bs):
        sample = []
        for shp in layer_shapes:
            key, sub = jax.random.split(key)
            sample.append(jax.random.normal(sub, shp, dtype=jnp.float32))
        grad.append(sample)

    loss = variance_loss(grad)
    loss = jax.block_until_ready(loss)

    # Reference check in plain JAX (same semantics as the PyTorch module).
    ref = sum(float(jnp.sum(t.astype(jnp.float32) ** 2)) for s in grad for t in s) / bs
    assert loss.shape == (1,)
    assert abs(float(loss[0]) - ref) < 1e-4 * max(1.0, abs(ref)), (loss, ref)

    print("KERNEL_OK")
</pallas_src>

<mosaic_0001>
module attributes {stable_mosaic.version = 11 : i64} {
  func.func @_sumsq_kernel(%arg0: i32, %arg1: i32, %arg2: memref<16x128xf32, #tpu.memory_space<vmem>>, %arg3: memref<8x128xf32, #tpu.memory_space<vmem>>) attributes {dimension_semantics = [#tpu.dimension_semantics<parallel>, #tpu.dimension_semantics<arbitrary>], iteration_bounds = array<i64: 2, 1>, scalar_prefetch = 0 : i64, scratch_operands = 0 : i64, tpu.core_type = #tpu.core_type<tc>, window_params = [{transform_indices = @transform_0, window_bounds = array<i64: 16, 128>}, {transform_indices = @transform_1, window_bounds = array<i64: 8, 128>}]} {
    %c0_i32 = arith.constant 0 : i32
    %0 = arith.cmpi eq, %arg1, %c0_i32 : i32
    %1 = arith.extui %0 : i1 to i32
    %c0_i32_0 = arith.constant 0 : i32
    %2 = arith.cmpi ne, %1, %c0_i32_0 : i32
    scf.if %2 {
      %cst_6 = arith.constant 0.000000e+00 : f32
      %10 = vector.broadcast %cst_6 : f32 to vector<8x128xf32>
      %c0_7 = arith.constant 0 : index
      %c0_8 = arith.constant 0 : index
      %11 = vector.load %arg3[%c0_7, %c0_8] : memref<8x128xf32, #tpu.memory_space<vmem>>, vector<8x128xf32>
      tpu.vector_store %arg3[%c0_7, %c0_8], %10 {strides = array<i32>} : memref<8x128xf32, #tpu.memory_space<vmem>>, vector<8x128xf32>,
    } else {
    }
    %c0 = arith.constant 0 : index
    %c0_1 = arith.constant 0 : index
    %3 = vector.load %arg2[%c0, %c0_1] : memref<16x128xf32, #tpu.memory_space<vmem>>, vector<16x128xf32>
    %4 = arith.mulf %3, %3 : vector<16x128xf32>
    %c0_2 = arith.constant 0 : index
    %c0_3 = arith.constant 0 : index
    %5 = vector.load %arg3[%c0_2, %c0_3] : memref<8x128xf32, #tpu.memory_space<vmem>>, vector<8x128xf32>
    %6 = vector.shape_cast %4 : vector<16x128xf32> to vector<2x8x128xf32>
    %cst = arith.constant dense<0.000000e+00> : vector<8x128xf32>
    %7 = vector.multi_reduction <add>, %6, %cst [0] : vector<2x8x128xf32> to vector<8x128xf32>
    %8 = arith.addf %5, %7 : vector<8x128xf32>
    %c0_4 = arith.constant 0 : index
    %c0_5 = arith.constant 0 : index
    %9 = vector.load %arg3[%c0_4, %c0_5] : memref<8x128xf32, #tpu.memory_space<vmem>>, vector<8x128xf32>
    tpu.vector_store %arg3[%c0_4, %c0_5], %8 {strides = array<i32>} : memref<8x128xf32, #tpu.memory_space<vmem>>, vector<8x128xf32>,
    return
  }
  func.func @transform_0(%arg0: i32, %arg1: i32) -> (i32, i32) {
    %c1_i32 = arith.constant 1 : i32
    %0 = arith.muli %arg0, %c1_i32 : i32
    %1 = arith.addi %0, %arg1 : i32
    %c0_i32 = arith.constant 0 : i32
    %c0_i32_0 = arith.constant 0 : i32
    return %1, %c0_i32 : i32, i32
  }
  func.func @transform_1(%arg0: i32, %arg1: i32) -> (i32, i32) {
    %c0_i32 = arith.constant 0 : i32
    %c0_i32_0 = arith.constant 0 : i32
    return %arg0, %c0_i32 : i32, i32
  }
}

</mosaic_0001>

<llo_original>
// kernel: tpu_custom_call.1
$region0: #{tpu_custom_call.1}
  #allocation0 [shape = 'u32[]', space=smem, size = 0x4, offset = 0x4, fixed_abs, tag = 'smem constant byte address 0x4 - core index']
  #allocation1 [shape = 'u32[144,128]{1,0:T(1,128)}', space=vmem, size = 0x12000, scoped, tag = 'internal scratch']
  %s0 = inlined_call_operand.hbm [shape: f32[32,128], index: 0, kind: input, shape index: {}]
  %s1 = inlined_call_operand.hbm [shape: f32[16,128], index: 1, kind: output, shape index: {}]
  %s2 = sld [smem:[#allocation0]]
  $region45: #{tpu_custom_call.1} parent=0
    _
  %s4 = ssub.s32 1, %s2
  %s5 = scalar_select 0, %s4, %s2
  $region1: #{tpu_custom_call.1} parent=0
    #allocation2 [shape = 'u8[16384]{0}', space=vmem, size = 0x4000, scoped, tag = 'input window, operand 0']
    #allocation3 [shape = 's32[2]{0}', space=sflag, size = 0x8, scoped, tag = 'scoped memory for tpu_custom_call.1']
    #allocation4 [shape = 's32[2]{0}', space=sflag, size = 0x8, scoped, tag = 'scoped memory for tpu_custom_call.1']
    #allocation5 [shape = 'u8[8192]{0}', space=vmem, size = 0x2000, scoped, tag = 'output window, operand 0']
    %6 = vsyncpa [#allocation3], 0
    %s7 = scalar_lea.sflag [#allocation3], 1
    %8 = vsyncpa %s7, 0
    %9 = vsyncpa [#allocation4], 0
    %s10 = scalar_lea.sflag [#allocation4], 1
    %11 = vsyncpa %s10, 0
    loop: start=0, step=1, limit=4
    $region2: #{tpu_custom_call.1} parent=1 // loop_pre_header
      _
    $region3: #{tpu_custom_call.1} parent=1 // loop_header
      %s13 = sphi 0, %s17
      %p14 = scmp.ge.s32.totalorder %s13, 4
      %s20 = sphi 0, %s32
      %s21 = sphi 0, %s28
      %s22 = sphi 0, %s20
      %s23 = sphi 0, %s21
      %s24 = sphi 0, %s22
      %s25 = sphi 0, %s23
      %s37 = sphi 0, %s39
      %s40 = sphi 0, %s37
      %s41 = sphi 0, %s40
      %s57 = sphi 0, %s41
      %s63 = sphi 0, %s65
      %s66 = sphi 0, %s63
      %s67 = sphi 0, %s66
      %s83 = sphi 0, %s67
    $region4: #{tpu_custom_call.1} parent=1 // loop_header_branch
      %16 = sbr.rel (%p14) target = $region8
    $region5: #{tpu_custom_call.1} parent=1 // loop_body
      %s18 = ssub.s32 %s13, 1
      %s19 = ssub.s32 %s13, 2
      %s26 = sadd.s32 1, %s21
      %p27 = scmp.ge.s32.totalorder %s26, 1
      %s28 = scalar_select %p27, 0, %s26
      %s29 = sadd.s32 1, %s20
      %s30 = scalar_select %p27, %s29, %s20
      %p31 = scmp.ge.s32.totalorder %s30, 2
      %s32 = scalar_select %p31, 0, %s30
      %s33 = sadd.s32 %s20, %s21
      %s34 = sadd.s32 %s32, %s28
      %s35 = ssub.s32 %s33, %s34
      %p36 = scmp.eq.s32.totalorder %s35, 0
      %s38 = sadd.s32 %s37, 1
      %s39 = scalar_select %p36, %s37, %s38
      %p42 = pneg %p36
      %p43 = scmp.eq.s32.totalorder %s13, 1
      %p44 = por %p42, %p43
      %p45 = scmp.ne.s32.totalorder %s37, %s40
      %p46 = scmp.eq.s32.totalorder %s13, 0
      %p47 = por %p45, %p46
      %p48 = scmp.ne.s32.totalorder %s37, %s40
      %p49 = scmp.eq.s32.totalorder %s18, 1
      %p50 = por %p48, %p49
      %p51 = scmp.ne.s32.totalorder %s40, %s41
      %p52 = scmp.eq.s32.totalorder %s18, 0
      %p53 = por %p51, %p52
      %p54 = scmp.ne.s32.totalorder %s40, %s41
      %p55 = scmp.eq.s32.totalorder %s19, 1
      %p56 = por %p54, %p55
      %p58 = scmp.ne.s32.totalorder %s41, %s57
      %p59 = scmp.eq.s32.totalorder %s19, 0
      %p60 = por %p58, %p59
      %s61 = ssub.s32 %s20, %s32
      %p62 = scmp.eq.s32.totalorder %s61, 0
      %s64 = sadd.s32 %s63, 1
      %s65 = scalar_select %p62, %s63, %s64
      %p68 = pneg %p62
      %p69 = scmp.eq.s32.totalorder %s13, 1
      %p70 = por %p68, %p69
      %p71 = scmp.ne.s32.totalorder %s63, %s66
      %p72 = scmp.eq.s32.totalorder %s13, 0
      %p73 = por %p71, %p72
      %p74 = scmp.ne.s32.totalorder %s63, %s66
      %p75 = scmp.eq.s32.totalorder %s18, 1
      %p76 = por %p74, %p75
      %p77 = scmp.ne.s32.totalorder %s66, %s67
      %p78 = scmp.eq.s32.totalorder %s18, 0
      %p79 = por %p77, %p78
      %p80 = scmp.ne.s32.totalorder %s66, %s67
      %p81 = scmp.eq.s32.totalorder %s19, 1
      %p82 = por %p80, %p81
      %p84 = scmp.ne.s32.totalorder %s67, %s83
      %p85 = scmp.eq.s32.totalorder %s19, 0
      %p86 = por %p84, %p85
      %p87 = scmp.le.s32.totalorder 1, %s13
      %p88 = scmp.lt.s32.totalorder %s13, 3
      %p89 = pnand %p87, %p88
      %p90 = pneg %p89
      // Predicated region
      $region9: #{tpu_custom_call.1} parent=5 // pred_check
        _
      $region10: #{tpu_custom_call.1} parent=5 // pred_check_branch
        %92 = sbr.rel (%p89) target = $region12
      $region11: #{tpu_custom_call.1} parent=5 // pred_region
        %s93 = ssub.s32 %s13, 1
      $region12: #{tpu_custom_call.1} parent=5 // pred_fallthru
        _
      %p94 = scmp.lt.s32.totalorder %s13, 2
      // Predicated region
      $region13: #{tpu_custom_call.1} parent=5 // pred_check
        %p95 = pneg %p94
      $region14: #{tpu_custom_call.1} parent=5 // pred_check_branch
        %97 = sbr.rel (%p95) target = $region16
      $region15: #{tpu_custom_call.1} parent=5 // pred_region
        // Predicated region
        $region17: #{tpu_custom_call.1} parent=15 // pred_check
          %p98 = pneg %p47
        $region18: #{tpu_custom_call.1} parent=15 // pred_check_branch
          %100 = sbr.rel (%p98) target = $region20
        $region19: #{tpu_custom_call.1} parent=15 // pred_region
          %s101 = sand.u32 %s37, 1
          %s102 = scalar_lea.sflag [#allocation3], %s101
          %s103 = sand.u32 %s37, 1
          %s104 = smul.addr %s103, 16
          %s105 = scalar_lea.vmem [#allocation2], %s104
          %s106 = sadd.s32 %s20, %s21
          %s107 = smul.u32 2, %s106
          %s109 = ssub.s32 256, 256
          %110 = vsyncadd %s102, %s109
          %s111 = smul.addr %s107, 128
          %s112 = scalar_lea.hbm %s0, %s111
          %s113 = sshll.u32 %s105, 4
          %s114 = int_to_ptr.vmem [resolvable:$true] %s113
          %119 = dma.hbm_to_vmem [thread:$0]  %s112, 256, %s114, %s102, 128, 128, 8
        $region20: #{tpu_custom_call.1} parent=15 // pred_fallthru
          _
      $region16: #{tpu_custom_call.1} parent=5 // pred_fallthru
        _
      %p120 = scmp.le.s32.totalorder 1, %s13
      %p121 = scmp.lt.s32.totalorder %s13, 3
      %p122 = pnand %p120, %p121
      %p123 = pneg %p122
      // Predicated region
      $region21: #{tpu_custom_call.1} parent=5 // pred_check
        _
      $region22: #{tpu_custom_call.1} parent=5 // pred_check_branch
        %125 = sbr.rel (%p122) target = $region24
      $region23: #{tpu_custom_call.1} parent=5 // pred_region
        %s126 = ssub.s32 %s13, 1
        %s127 = sand.u32 %s40, 1
        %s128 = scalar_lea.sflag [#allocation3], %s127
        %s129 = sand.u32 %s40, 1
        %s130 = smul.addr %s129, 16
        %s131 = scalar_lea.vmem [#allocation2], %s130
        // Predicated region
        $region25: #{tpu_custom_call.1} parent=23 // pred_check
          %p132 = pneg %p53
        $region26: #{tpu_custom_call.1} parent=23 // pred_check_branch
          %134 = sbr.rel (%p132) target = $region28
        $region27: #{tpu_custom_call.1} parent=23 // pred_region
          %135 = dma.done %s128, 256
        $region28: #{tpu_custom_call.1} parent=23 // pred_fallthru
          _
        %s136 = sand.u32 %s40, 1
        %s137 = scalar_lea.sflag [#allocation3], %s136
        %s138 = sand.u32 %s40, 1
        %s139 = smul.addr %s138, 16
        %s140 = scalar_lea.vmem [#allocation2], %s139
        %p141 = pneg %p53
        %p142 = pneg %p50
        %p143 = pneg %p79
        %p144 = pneg %p76
        %s145 = sand.u32 %s66, 1
        %s146 = scalar_lea.sflag [#allocation4], %s145
        %s147 = sand.u32 %s66, 1
        %s148 = smul.addr %s147, 8
        %s149 = scalar_lea.vmem [#allocation5], %s148
        %s150 = sadd.s32 %s22, %s23
        %s151 = smul.u32 2, %s150
        %p152 = scmp.eq.s32.totalorder %s23, 0
        // Predicated region
        $region29: #{tpu_custom_call.1} parent=23 // pred_check
          %p153 = pneg %p152
        $region30: #{tpu_custom_call.1} parent=23 // pred_check_branch
          %155 = sbr.rel (%p153) target = $region32
        $region31: #{tpu_custom_call.1} parent=23 // pred_region
          %156 = vst [vmem:[%s149] sm:$0xff] 0.0
        $region32: #{tpu_custom_call.1} parent=23 // pred_fallthru
          _
        %v157 = vld [vmem:[%s131] sm:$0xff]
        %v158 = vld [vmem:[%s131 + $0x8] sm:$0xff]
        %v159 = vmul.f32 %v157, %v157
        %v160 = vmul.f32 %v158, %v158
        %v161 = vld [vmem:[%s149] sm:$0xff]
        %v162 = vadd.f32 %v159, %v160
        %v163 = vadd.f32 %v161, %v162
        %164 = vst [vmem:[%s149] sm:$0xff] %v163
        %s165 = sand.u32 %s66, 1
        %s166 = scalar_lea.sflag [#allocation4], %s165
        %s167 = sand.u32 %s66, 1
        %s168 = smul.addr %s167, 8
        %s169 = scalar_lea.vmem [#allocation5], %s168
        // Predicated region
        $region33: #{tpu_custom_call.1} parent=23 // pred_check
          %p170 = pneg %p76
        $region34: #{tpu_custom_call.1} parent=23 // pred_check_branch
          %172 = sbr.rel (%p170) target = $region36
        $region35: #{tpu_custom_call.1} parent=23 // pred_region
          %s174 = ssub.s32 128, 128
          %175 = vsyncadd %s166, %s174
          %s176 = smul.addr %s22, 128
          %s177 = scalar_lea.hbm %s1, %s176
          %s179 = sshll.u32 %s169, 4
          %s180 = int_to_ptr.vmem [resolvable:$true] %s179
          %182 = dma.vmem_to_hbm [thread:$0]  %s180, 128, %s177, %s166
        $region36: #{tpu_custom_call.1} parent=23 // pred_fallthru
          _
      $region24: #{tpu_custom_call.1} parent=5 // pred_fallthru
        _
      %p183 = scmp.le.s32.totalorder 2, %s13
      // Predicated region
      $region37: #{tpu_custom_call.1} parent=5 // pred_check
        %p184 = pneg %p183
      $region38: #{tpu_custom_call.1} parent=5 // pred_check_branch
        %186 = sbr.rel (%p184) target = $region40
      $region39: #{tpu_custom_call.1} parent=5 // pred_region
        %s187 = ssub.s32 %s13, 2
        // Predicated region
        $region41: #{tpu_custom_call.1} parent=39 // pred_check
          %p188 = pneg %p82
        $region42: #{tpu_custom_call.1} parent=39 // pred_check_branch
          %190 = sbr.rel (%p188) target = $region44
        $region43: #{tpu_custom_call.1} parent=39 // pred_region
          %s191 = sand.u32 %s67, 1
          %s192 = scalar_lea.sflag [#allocation4], %s191
          %s193 = sand.u32 %s67, 1
          %s194 = smul.addr %s193, 8
          %s195 = scalar_lea.vmem [#allocation5], %s194
          %196 = dma.done %s192, 128
        $region44: #{tpu_custom_call.1} parent=39 // pred_fallthru
          _
      $region40: #{tpu_custom_call.1} parent=5 // pred_fallthru
        _
    $region6: #{tpu_custom_call.1} parent=1 // loop_footer
      %s17 = sadd.s32 1, %s13
    $region7: #{tpu_custom_call.1} parent=1 // loop_footer_branch
      %12 = sbr.rel target = $region3
    $region8: #{tpu_custom_call.1} parent=1 // loop_exit
      _
    %197 = vsyncpa [#allocation3], 1
    %s198 = scalar_lea.sflag [#allocation3], 1
    %199 = vsyncpa %s198, 1
    %200 = vsyncpa [#allocation4], 1
    %s201 = scalar_lea.sflag [#allocation4], 1
    %202 = vsyncpa %s201, 1

</llo_original>
